<compile_context>
chip_gen: v7x
topology: tpu7x:2x2x1
jax: 0.10.0
libtpu: 0.0.40
codegen_flags: <defaults>
</compile_context>

<pallas_src>
import jax
import jax.numpy as jnp
from jax.experimental import pallas as pl
from jax.experimental.pallas import tpu as pltpu


# ----------------------------------------------------------------------------- kernel
def _mlp_kernel(x_ref, w1_ref, b1_ref, w2_ref, b2_ref, w3_ref, b3_ref, o_ref):
    # Cast f32 activations to bf16 on-chip (MXU operands), accumulate in f32.
    x = x_ref[...].astype(w1_ref.dtype)
    # fc1 + relu
    h1 = jnp.dot(x, w1_ref[...], preferred_element_type=jnp.float32)
    h1 = jnp.maximum(h1 + b1_ref[...], 0.0)
    # fc2 + relu
    h2 = jnp.dot(h1.astype(w2_ref.dtype), w2_ref[...],
                 preferred_element_type=jnp.float32)
    h2 = jnp.maximum(h2 + b2_ref[...], 0.0)
    # out + sigmoid; slice the 128-lane-padded logits down to the real output
    # width before the store so the HBM writeback is only out_dim columns wide.
    logits = jnp.dot(h2.astype(w3_ref.dtype), w3_ref[...],
                     preferred_element_type=jnp.float32) + b3_ref[...]
    out_dim = o_ref.shape[-1]
    o_ref[...] = jax.nn.sigmoid(logits[:, :out_dim]).astype(o_ref.dtype)


# ----------------------------------------------------------------------------- helpers
def _round_up(v, m):
    return (v + m - 1) // m * m


def _cdiv(a, b):
    return -(-a // b)


def prepare_params(w1, b1, w2, b2, w3, b3, *, compute_dtype=jnp.bfloat16):
    """One-time weight prep (hoisted out of the per-call path).

    Pads hidden/output feature dims to 128-lane multiples (zeros -> same math)
    and casts the matmul operands to bf16.  Biases stay f32.
    """
    f = w1.shape[0]
    h1_dim, h2_dim, out_dim = w1.shape[1], w2.shape[1], w3.shape[1]
    h1p = _round_up(h1_dim, 128)
    h2p = _round_up(h2_dim, 128)
    outp = _round_up(out_dim, 128)

    def pad2(a, rows, cols, dtype):
        return jnp.pad(a, ((0, rows - a.shape[0]),
                           (0, cols - a.shape[1]))).astype(dtype)

    w1p = pad2(w1, f, h1p, compute_dtype)
    w2p = pad2(w2, h1p, h2p, compute_dtype)
    w3p = pad2(w3, h2p, outp, compute_dtype)
    b1p = pad2(b1.reshape(1, -1), 1, h1p, jnp.float32)
    b2p = pad2(b2.reshape(1, -1), 1, h2p, jnp.float32)
    b3p = pad2(b3.reshape(1, -1), 1, outp, jnp.float32)
    return (w1p, b1p, w2p, b2p, w3p, b3p, out_dim)


def _choose_tiling(n, tm_target):
    """Pick a row tile so that: the grid divides exactly, row padding is tiny
    (<= 8 rows per tile), and there are >= 2 grid steps when there is enough
    work (v7x megacore)."""
    n8 = _round_up(max(n, 8), 8)
    num_tiles = max(1, _cdiv(n8, max(tm_target, 8)))
    if n8 >= 16:
        num_tiles = max(num_tiles, 2)
    tm = _round_up(_cdiv(n8, num_tiles), 8)
    n_pad = num_tiles * tm
    return tm, n_pad, num_tiles


# ----------------------------------------------------------------------------- forward
def neural_net_forward(x, params, *, tm=2048):
    """Forward pass of NeuralNet.

    x:      (N, input_size) f32
    params: output of `prepare_params` (padded/cast weights, f32 biases)
    Returns (N, output_size) f32.
    """
    w1p, b1p, w2p, b2p, w3p, b3p, out_dim = params
    n, f = x.shape

    tm, n_pad, num_tiles = _choose_tiling(n, tm)
    xp = x if n_pad == n else jnp.pad(x, ((0, n_pad - n), (0, 0)))

    # weights/biases: same block every grid step -> stay resident in VMEM
    resident = lambda a: pl.BlockSpec(a.shape, lambda i: (0,) * a.ndim)

    out = pl.pallas_call(
        _mlp_kernel,
        out_shape=jax.ShapeDtypeStruct((n_pad, out_dim), jnp.float32),
        grid=(num_tiles,),
        in_specs=[
            pl.BlockSpec((tm, f), lambda i: (i, 0)),   # x: tiled over batch
            resident(w1p), resident(b1p),
            resident(w2p), resident(b2p),
            resident(w3p), resident(b3p),
        ],
        out_specs=pl.BlockSpec((tm, out_dim), lambda i: (i, 0)),
        compiler_params=pltpu.CompilerParams(
            dimension_semantics=("parallel",)),        # megacore on v7x
    )(xp, w1p, b1p, w2p, b2p, w3p, b3p)

    return out[:n] if n_pad != n else out


# ----------------------------------------------------------------------------- init / reference
def init_params(key, input_size=21, hidden_size1=120, hidden_size2=100,
                output_size=6):
    """Deterministic init mimicking nn.Linear's U(-1/sqrt(fan_in), 1/sqrt(fan_in))."""
    ks = jax.random.split(key, 6)

    def linear(kw, kb, fan_in, fan_out):
        bound = 1.0 / jnp.sqrt(float(fan_in))
        w = jax.random.uniform(kw, (fan_in, fan_out), jnp.float32, -bound, bound)
        b = jax.random.uniform(kb, (fan_out,), jnp.float32, -bound, bound)
        return w, b

    w1, b1 = linear(ks[0], ks[1], input_size, hidden_size1)
    w2, b2 = linear(ks[2], ks[3], hidden_size1, hidden_size2)
    w3, b3 = linear(ks[4], ks[5], hidden_size2, output_size)
    return w1, b1, w2, b2, w3, b3


def _reference(x, w1, b1, w2, b2, w3, b3):
    h1 = jnp.maximum(x @ w1 + b1[None, :], 0.0)
    h2 = jnp.maximum(h1 @ w2 + b2[None, :], 0.0)
    return jax.nn.sigmoid(h2 @ w3 + b3[None, :])


# ----------------------------------------------------------------------------- main
if __name__ == "__main__":
    key = jax.random.PRNGKey(0)
    k_params, k_x1, k_x2 = jax.random.split(key, 3)

    input_size, output_size = 21, 6
    w1, b1, w2, b2, w3, b3 = init_params(k_params, input_size=input_size)

    # Hoisted one-time weight prep (pad + bf16 cast).
    params = prepare_params(w1, b1, w2, b2, w3, b3)

    # --- small batch (single grid step) ---------------------------------------
    batch = 8
    x = jax.random.normal(k_x1, (batch, input_size), jnp.float32)
    out = jax.block_until_ready(neural_net_forward(x, params))
    ref = _reference(x, w1, b1, w2, b2, w3, b3)
    assert out.shape == (batch, output_size)
    # bf16 matmul operands -> loosened tolerance vs f32 reference
    assert jnp.allclose(out, ref, atol=2e-2), "mismatch vs reference (batch=8)"

    # --- ragged batch exercising the multi-step grid + row-padding path -------
    batch2 = 130
    x2 = jax.random.normal(k_x2, (batch2, input_size), jnp.float32)
    out2 = jax.block_until_ready(neural_net_forward(x2, params, tm=64))
    ref2 = _reference(x2, w1, b1, w2, b2, w3, b3)
    assert out2.shape == (batch2, output_size)
    assert jnp.allclose(out2, ref2, atol=2e-2), "mismatch vs reference (batch=130)"

    print("KERNEL_OK")
</pallas_src>

<mosaic_0001>
module attributes {stable_mosaic.version = 11 : i64} {
  func.func @_mlp_kernel(%arg0: i32, %arg1: memref<8x21xf32, #tpu.memory_space<vmem>>, %arg2: memref<21x128xbf16, #tpu.memory_space<vmem>>, %arg3: memref<1x128xf32, #tpu.memory_space<vmem>>, %arg4: memref<128x128xbf16, #tpu.memory_space<vmem>>, %arg5: memref<1x128xf32, #tpu.memory_space<vmem>>, %arg6: memref<128x128xbf16, #tpu.memory_space<vmem>>, %arg7: memref<1x128xf32, #tpu.memory_space<vmem>>, %arg8: memref<8x6xf32, #tpu.memory_space<vmem>>) attributes {dimension_semantics = [#tpu.dimension_semantics<parallel>], iteration_bounds = array<i64: 1>, scalar_prefetch = 0 : i64, scratch_operands = 0 : i64, tpu.core_type = #tpu.core_type<tc>, window_params = [{transform_indices = @transform_0, window_bounds = array<i64: 8, 21>}, {pipeline_mode = #tpu.pipeline_mode<synchronous>, transform_indices = @transform_1, window_bounds = array<i64: 21, 128>}, {pipeline_mode = #tpu.pipeline_mode<synchronous>, transform_indices = @transform_2, window_bounds = array<i64: 1, 128>}, {pipeline_mode = #tpu.pipeline_mode<synchronous>, transform_indices = @transform_3, window_bounds = array<i64: 128, 128>}, {pipeline_mode = #tpu.pipeline_mode<synchronous>, transform_indices = @transform_4, window_bounds = array<i64: 1, 128>}, {pipeline_mode = #tpu.pipeline_mode<synchronous>, transform_indices = @transform_5, window_bounds = array<i64: 128, 128>}, {pipeline_mode = #tpu.pipeline_mode<synchronous>, transform_indices = @transform_6, window_bounds = array<i64: 1, 128>}, {transform_indices = @transform_7, window_bounds = array<i64: 8, 6>}]} {
    %c0 = arith.constant 0 : index
    %c0_0 = arith.constant 0 : index
    %0 = vector.load %arg1[%c0, %c0_0] : memref<8x21xf32, #tpu.memory_space<vmem>>, vector<8x21xf32>
    %1 = arith.truncf %0 : vector<8x21xf32> to vector<8x21xbf16>
    %c0_1 = arith.constant 0 : index
    %c0_2 = arith.constant 0 : index
    %2 = vector.load %arg2[%c0_1, %c0_2] : memref<21x128xbf16, #tpu.memory_space<vmem>>, vector<21x128xbf16>
    %cst = arith.constant dense<0.000000e+00> : vector<8x128xf32>
    %3 = tpu.matmul %1, %2, %cst {dimension_numbers = #tpu.dot_dimension_numbers<[1], [0], [0], [1], [0, 0, 1, 1], [], []>} : vector<8x21xbf16>, vector<21x128xbf16>, vector<8x128xf32> -> vector<8x128xf32>
    %c0_3 = arith.constant 0 : index
    %c0_4 = arith.constant 0 : index
    %4 = vector.load %arg3[%c0_3, %c0_4] : memref<1x128xf32, #tpu.memory_space<vmem>>, vector<1x128xf32>
    %5 = vector.broadcast %4 : vector<1x128xf32> to vector<8x128xf32>
    %6 = arith.addf %3, %5 : vector<8x128xf32>
    %cst_5 = arith.constant 0.000000e+00 : f32
    %7 = vector.broadcast %cst_5 : f32 to vector<8x128xf32>
    %8 = arith.maximumf %6, %7 : vector<8x128xf32>
    %9 = arith.truncf %8 : vector<8x128xf32> to vector<8x128xbf16>
    %c0_6 = arith.constant 0 : index
    %c0_7 = arith.constant 0 : index
    %10 = vector.load %arg4[%c0_6, %c0_7] : memref<128x128xbf16, #tpu.memory_space<vmem>>, vector<128x128xbf16>
    %cst_8 = arith.constant dense<0.000000e+00> : vector<8x128xf32>
    %11 = tpu.matmul %9, %10, %cst_8 {dimension_numbers = #tpu.dot_dimension_numbers<[1], [0], [0], [1], [0, 0, 1, 1], [], []>} : vector<8x128xbf16>, vector<128x128xbf16>, vector<8x128xf32> -> vector<8x128xf32>
    %c0_9 = arith.constant 0 : index
    %c0_10 = arith.constant 0 : index
    %12 = vector.load %arg5[%c0_9, %c0_10] : memref<1x128xf32, #tpu.memory_space<vmem>>, vector<1x128xf32>
    %13 = vector.broadcast %12 : vector<1x128xf32> to vector<8x128xf32>
    %14 = arith.addf %11, %13 : vector<8x128xf32>
    %cst_11 = arith.constant 0.000000e+00 : f32
    %15 = vector.broadcast %cst_11 : f32 to vector<8x128xf32>
    %16 = arith.maximumf %14, %15 : vector<8x128xf32>
    %17 = arith.truncf %16 : vector<8x128xf32> to vector<8x128xbf16>
    %c0_12 = arith.constant 0 : index
    %c0_13 = arith.constant 0 : index
    %18 = vector.load %arg6[%c0_12, %c0_13] : memref<128x128xbf16, #tpu.memory_space<vmem>>, vector<128x128xbf16>
    %cst_14 = arith.constant dense<0.000000e+00> : vector<8x128xf32>
    %19 = tpu.matmul %17, %18, %cst_14 {dimension_numbers = #tpu.dot_dimension_numbers<[1], [0], [0], [1], [0, 0, 1, 1], [], []>} : vector<8x128xbf16>, vector<128x128xbf16>, vector<8x128xf32> -> vector<8x128xf32>
    %c0_15 = arith.constant 0 : index
    %c0_16 = arith.constant 0 : index
    %20 = vector.load %arg7[%c0_15, %c0_16] : memref<1x128xf32, #tpu.memory_space<vmem>>, vector<1x128xf32>
    %21 = vector.broadcast %20 : vector<1x128xf32> to vector<8x128xf32>
    %22 = arith.addf %19, %21 : vector<8x128xf32>
    %23 = vector.extract_strided_slice %22 {offsets = [0, 0], sizes = [8, 6], strides = [1, 1]} : vector<8x128xf32> to vector<8x6xf32>
    %24 = arith.negf %23 : vector<8x6xf32>
    %25 = math.exp %24 : vector<8x6xf32>
    %cst_17 = arith.constant 1.000000e+00 : f32
    %26 = vector.broadcast %cst_17 : f32 to vector<8x6xf32>
    %27 = arith.addf %26, %25 : vector<8x6xf32>
    %28 = arith.divf %26, %27 : vector<8x6xf32>
    %c0_18 = arith.constant 0 : index
    %c0_19 = arith.constant 0 : index
    %29 = vector.load %arg8[%c0_18, %c0_19] : memref<8x6xf32, #tpu.memory_space<vmem>>, vector<8x6xf32>
    tpu.vector_store %arg8[%c0_18, %c0_19], %28 {strides = array<i32>} : memref<8x6xf32, #tpu.memory_space<vmem>>, vector<8x6xf32>,
    return
  }
  func.func @transform_0(%arg0: i32) -> (i32, i32) {
    %c0_i32 = arith.constant 0 : i32
    %c0_i32_0 = arith.constant 0 : i32
    return %arg0, %c0_i32 : i32, i32
  }
  func.func @transform_1(%arg0: i32) -> (i32, i32) {
    %c0_i32 = arith.constant 0 : i32
    %c0_i32_0 = arith.constant 0 : i32
    %c0_i32_1 = arith.constant 0 : i32
    return %c0_i32, %c0_i32_0 : i32, i32
  }
  func.func @transform_2(%arg0: i32) -> (i32, i32) {
    %c0_i32 = arith.constant 0 : i32
    %c0_i32_0 = arith.constant 0 : i32
    %c0_i32_1 = arith.constant 0 : i32
    return %c0_i32, %c0_i32_0 : i32, i32
  }
  func.func @transform_3(%arg0: i32) -> (i32, i32) {
    %c0_i32 = arith.constant 0 : i32
    %c0_i32_0 = arith.constant 0 : i32
    %c0_i32_1 = arith.constant 0 : i32
    return %c0_i32, %c0_i32_0 : i32, i32
  }
  func.func @transform_4(%arg0: i32) -> (i32, i32) {
    %c0_i32 = arith.constant 0 : i32
    %c0_i32_0 = arith.constant 0 : i32
    %c0_i32_1 = arith.constant 0 : i32
    return %c0_i32, %c0_i32_0 : i32, i32
  }
  func.func @transform_5(%arg0: i32) -> (i32, i32) {
    %c0_i32 = arith.constant 0 : i32
    %c0_i32_0 = arith.constant 0 : i32
    %c0_i32_1 = arith.constant 0 : i32
    return %c0_i32, %c0_i32_0 : i32, i32
  }
  func.func @transform_6(%arg0: i32) -> (i32, i32) {
    %c0_i32 = arith.constant 0 : i32
    %c0_i32_0 = arith.constant 0 : i32
    %c0_i32_1 = arith.constant 0 : i32
    return %c0_i32, %c0_i32_0 : i32, i32
  }
  func.func @transform_7(%arg0: i32) -> (i32, i32) {
    %c0_i32 = arith.constant 0 : i32
    %c0_i32_0 = arith.constant 0 : i32
    return %arg0, %c0_i32 : i32, i32
  }
}

</mosaic_0001>

<llo_original>
// kernel: tpu_custom_call.1
$region0: #{tpu_custom_call.1}
  #allocation0 [shape = 'u32[]', space=smem, size = 0x4, offset = 0x4, fixed_abs, tag = 'smem constant byte address 0x4 - core index']
  #allocation1 [shape = 'u32[144,128]{1,0:T(1,128)}', space=vmem, size = 0x12000, scoped, tag = 'internal scratch']
  %s0 = inlined_call_operand.hbm [shape: f32[8,21], index: 0, kind: input, shape index: {}]
  %s1 = inlined_call_operand.hbm [shape: bf16[21,128], index: 1, kind: input, shape index: {}]
  %s2 = inlined_call_operand.vmem [shape: f32[1,128], index: 2, kind: input, shape index: {}]
  %s3 = inlined_call_operand.hbm [shape: bf16[128,128], index: 3, kind: input, shape index: {}]
  %s4 = inlined_call_operand.vmem [shape: f32[1,128], index: 4, kind: input, shape index: {}]
  %s5 = inlined_call_operand.hbm [shape: bf16[128,128], index: 5, kind: input, shape index: {}]
  %s6 = inlined_call_operand.vmem [shape: f32[1,128], index: 6, kind: input, shape index: {}]
  %s7 = inlined_call_operand.hbm [shape: f32[8,6], index: 7, kind: output, shape index: {}]
  %s8 = sld [smem:[#allocation0]]
  $region54: #{tpu_custom_call.1} parent=0
    _
  %s10 = ssub.s32 1, %s8
  %s11 = scalar_select 0, %s10, %s8
  $region1: #{tpu_custom_call.1} parent=0
    #allocation2 [shape = 'u8[4096]{0}', space=vmem, size = 0x1000, scoped, tag = 'input window, operand 0, single buffered']
    #allocation3 [shape = 's32[1]{0}', space=sflag, size = 0x4, scoped, tag = 'scoped memory for tpu_custom_call.1']
    #allocation4 [shape = 's32[1]{0}', space=sflag, size = 0x4, scoped, tag = 'scoped memory for tpu_custom_call.1']
    #allocation5 [shape = 'u8[6144]{0}', space=vmem, size = 0x1800, scoped, tag = 'input window, operand 1, single buffered']
    #allocation6 [shape = 's32[1]{0}', space=sflag, size = 0x4, scoped, tag = 'scoped memory for tpu_custom_call.1']
    #allocation7 [shape = 'u8[32768]{0}', space=vmem, size = 0x8000, scoped, tag = 'input window, operand 3, single buffered']
    #allocation8 [shape = 'u8[32768]{0}', space=vmem, size = 0x8000, scoped, tag = 'input window, operand 5, single buffered']
    #allocation9 [shape = 's32[1]{0}', space=sflag, size = 0x4, scoped, tag = 'scoped memory for tpu_custom_call.1']
    #allocation10 [shape = 'u8[4096]{0}', space=vmem, size = 0x1000, scoped, tag = 'output window, operand 0, single buffered']
    %12 = vsyncpa [#allocation3], 0
    %13 = vsyncpa [#allocation6], 0
    %14 = vsyncpa [#allocation9], 0
    %15 = vsyncpa [#allocation4], 0
    // Predicated region
    $region2: #{tpu_custom_call.1} parent=1 // pred_check
      _
    $region3: #{tpu_custom_call.1} parent=1 // pred_check_branch
      %17 = sbr.rel (0) target = $region5
    $region4: #{tpu_custom_call.1} parent=1 // pred_region
      %s19 = ssub.s32 128, 128
      %20 = vsyncadd [#allocation3], %s19
      %s22 = sshll.u32 [#allocation2], 4
      %s23 = int_to_ptr.vmem [resolvable:$true] %s22
      %25 = dma.hbm_to_vmem [thread:$0]  %s0, 128, %s23, [#allocation3]
    $region5: #{tpu_custom_call.1} parent=1 // pred_fallthru
      _
    // Predicated region
    $region6: #{tpu_custom_call.1} parent=1 // pred_check
      _
    $region7: #{tpu_custom_call.1} parent=1 // pred_check_branch
      %27 = sbr.rel (0) target = $region9
    $region8: #{tpu_custom_call.1} parent=1 // pred_region
      %s29 = ssub.s32 192, 192
      %30 = vsyncadd [#allocation6], %s29
      %s31 = sshll.u32 [#allocation5], 4
      %s32 = int_to_ptr.vmem [resolvable:$true] %s31
      %37 = dma.hbm_to_vmem [thread:$0]  %s1, 192, %s32, [#allocation6], 64, 64, 4
    $region9: #{tpu_custom_call.1} parent=1 // pred_fallthru
      _
    // Predicated region
    $region10: #{tpu_custom_call.1} parent=1 // pred_check
      _
    $region11: #{tpu_custom_call.1} parent=1 // pred_check_branch
      %39 = sbr.rel (0) target = $region13
    $region12: #{tpu_custom_call.1} parent=1 // pred_region
      _
    $region13: #{tpu_custom_call.1} parent=1 // pred_fallthru
      _
    // Predicated region
    $region14: #{tpu_custom_call.1} parent=1 // pred_check
      _
    $region15: #{tpu_custom_call.1} parent=1 // pred_check_branch
      %41 = sbr.rel (0) target = $region17
    $region16: #{tpu_custom_call.1} parent=1 // pred_region
      %s43 = ssub.s32 1024, 1024
      %44 = vsyncadd [#allocation6], %s43
      %s45 = sshll.u32 [#allocation7], 4
      %s46 = int_to_ptr.vmem [resolvable:$true] %s45
      %51 = dma.hbm_to_vmem [thread:$0]  %s3, 1024, %s46, [#allocation6], 64, 64, 4
    $region17: #{tpu_custom_call.1} parent=1 // pred_fallthru
      _
    // Predicated region
    $region18: #{tpu_custom_call.1} parent=1 // pred_check
      _
    $region19: #{tpu_custom_call.1} parent=1 // pred_check_branch
      %53 = sbr.rel (0) target = $region21
    $region20: #{tpu_custom_call.1} parent=1 // pred_region
      _
    $region21: #{tpu_custom_call.1} parent=1 // pred_fallthru
      _
    // Predicated region
    $region22: #{tpu_custom_call.1} parent=1 // pred_check
      _
    $region23: #{tpu_custom_call.1} parent=1 // pred_check_branch
      %55 = sbr.rel (0) target = $region25
    $region24: #{tpu_custom_call.1} parent=1 // pred_region
      %s57 = ssub.s32 1024, 1024
      %58 = vsyncadd [#allocation9], %s57
      %s59 = sshll.u32 [#allocation8], 4
      %s60 = int_to_ptr.vmem [resolvable:$true] %s59
      %65 = dma.hbm_to_vmem [thread:$0]  %s5, 1024, %s60, [#allocation9], 64, 64, 4
    $region25: #{tpu_custom_call.1} parent=1 // pred_fallthru
      _
    // Predicated region
    $region26: #{tpu_custom_call.1} parent=1 // pred_check
      _
    $region27: #{tpu_custom_call.1} parent=1 // pred_check_branch
      %67 = sbr.rel (0) target = $region29
    $region28: #{tpu_custom_call.1} parent=1 // pred_region
      _
    $region29: #{tpu_custom_call.1} parent=1 // pred_fallthru
      _
    // Predicated region
    $region30: #{tpu_custom_call.1} parent=1 // pred_check
      _
    $region31: #{tpu_custom_call.1} parent=1 // pred_check_branch
      %69 = sbr.rel (0) target = $region33
    $region32: #{tpu_custom_call.1} parent=1 // pred_region
      %70 = dma.done [#allocation3], 128
    $region33: #{tpu_custom_call.1} parent=1 // pred_fallthru
      _
    // Predicated region
    $region34: #{tpu_custom_call.1} parent=1 // pred_check
      _
    $region35: #{tpu_custom_call.1} parent=1 // pred_check_branch
      %72 = sbr.rel (0) target = $region37
    $region36: #{tpu_custom_call.1} parent=1 // pred_region
      %73 = dma.done [#allocation6], 192
    $region37: #{tpu_custom_call.1} parent=1 // pred_fallthru
      _
    // Predicated region
    $region38: #{tpu_custom_call.1} parent=1 // pred_check
      _
    $region39: #{tpu_custom_call.1} parent=1 // pred_check_branch
      %75 = sbr.rel (0) target = $region41
    $region40: #{tpu_custom_call.1} parent=1 // pred_region
      %76 = dma.done [#allocation6], 1024
    $region41: #{tpu_custom_call.1} parent=1 // pred_fallthru
      _
    // Predicated region
    $region42: #{tpu_custom_call.1} parent=1 // pred_check
      _
    $region43: #{tpu_custom_call.1} parent=1 // pred_check_branch
      %78 = sbr.rel (0) target = $region45
    $region44: #{tpu_custom_call.1} parent=1 // pred_region
      %79 = dma.done [#allocation9], 1024
    $region45: #{tpu_custom_call.1} parent=1 // pred_fallthru
      _
    %v81 = vld [vmem:[#allocation2] sm:$0xff]
    %v82 = vpack.c.bf16 %v81, %v81
    %v83 = vld [vmem:[#allocation5] sm:$0xf]
    %v84 = vld [vmem:[#allocation5 + $0x4] sm:$0xf]
    %v85 = vld [vmem:[#allocation5 + $0x8] sm:$0x7]
    %v86 = vld [vmem:[%s2] sm:$0x1]
    %v88 = vlaneseq
    %v89 = vshrl.u32 %v88, 7
    %v90 = vsub.s32 0, %v89
    %v91 = vrot.slane %v86, %v90
    %v96 = vunpack.c.l.b16 %v83
    %v97 = vunpack.c.l.b16 %v84
    %v98 = vunpack.c.l.b16 %v85
    %v99 = vpack.c.b16 %v97, %v96
    %v100 = vpack.c.b16 %v98, %v98
    %vm102 = vcmask 171008
    %v104 = vsel %vm102, %v82, 0
    %vm106 = vcmask 1041408
    %vm107 = vcmask 1042432
    %v108 = vsel %vm106, 4294967295, 65535
    %v109 = vsel %vm107, %v108, 0
    %v111 = vand.u32 %v100, %v109
    %113 = vmatprep.subr.bf16.mxu0 0
    %114 = vmatpush1.bf16.msra.mxu0 %v99
    %115 = vmatprep.subr.bf16.mxu0 0
    %116 = vmatpush1.bf16.msra.mxu0 %v111
    %117 = vmatprep.subr.bf16.mxu0 0
    %118 = vmatpush1.bf16.msra.mxu0 0
    %119 = vmatprep.subr.bf16.mxu0 0
    %120 = vmatpush1.bf16.msra.mxu0 0
    %121 = vmatprep.subr.bf16.mxu0 0
    %122 = vmatpush1.bf16.msra.mxu0 0
    %123 = vmatprep.subr.bf16.mxu0 0
    %124 = vmatpush1.bf16.msra.mxu0 0
    %125 = vmatprep.subr.bf16.mxu0 0
    %126 = vmatpush1.bf16.msra.mxu0 0
    %127 = vmatprep.subr.bf16.mxu0 0
    %128 = vmatpush1.bf16.msra.mxu0 0
    %129 = vmatprep.subr.bf16.mxu0 0
    %130 = vmatpush1.bf16.msra.mxu0 0
    %131 = vmatprep.subr.bf16.mxu0 0
    %132 = vmatpush1.bf16.msra.mxu0 0
    %133 = vmatprep.subr.bf16.mxu0 0
    %134 = vmatpush1.bf16.msra.mxu0 0
    %135 = vmatprep.subr.bf16.mxu0 0
    %136 = vmatpush1.bf16.msra.mxu0 0
    %137 = vmatprep.subr.bf16.mxu0 0
    %138 = vmatpush1.bf16.msra.mxu0 0
    %139 = vmatprep.subr.bf16.mxu0 0
    %140 = vmatpush1.bf16.msra.mxu0 0
    %141 = vmatprep.subr.bf16.mxu0 0
    %142 = vmatpush1.bf16.msra.mxu0 0
    %143 = vmatprep.subr.bf16.mxu0 0
    %144 = vmatpush1.bf16.msra.mxu0 0
    %145 = vmatprep.mubr.bf16.mxu0 0
    %146 = vmatmul.mubr.bf16.gmra.mrb[0].mxu0 %v104
    %v147 = vpop.f32.mrb[0].mxu0
    %v148 = vadd.f32 %v91, %v147
    %v149 = vpop.f32.mrb[0].mxu0
    %v150 = vpop.f32.mrb[0].mxu0
    %v151 = vpop.f32.mrb[0].mxu0
    %152 = vdwg.mxu0
    %v153 = vmax.f32 %v148, 0.0
    %v154 = vpack.c.bf16 %v153, %v153
    %v155 = vld [vmem:[#allocation7] sm:$0xf]
    %v156 = vld [vmem:[#allocation7 + $0x4] sm:$0xf]
    %v157 = vld [vmem:[#allocation7 + $0x8] sm:$0xf]
    %v158 = vld [vmem:[#allocation7 + $0xc] sm:$0xf]
    %v159 = vld [vmem:[#allocation7 + $0x10] sm:$0xf]
    %v160 = vld [vmem:[#allocation7 + $0x14] sm:$0xf]
    %v161 = vld [vmem:[#allocation7 + $0x18] sm:$0xf]
    %v162 = vld [vmem:[#allocation7 + $0x1c] sm:$0xf]
    %v163 = vld [vmem:[#allocation7 + $0x20] sm:$0xf]
    %v164 = vld [vmem:[#allocation7 + $0x24] sm:$0xf]
    %v165 = vld [vmem:[#allocation7 + $0x28] sm:$0xf]
    %v166 = vld [vmem:[#allocation7 + $0x2c] sm:$0xf]
    %v167 = vld [vmem:[#allocation7 + $0x30] sm:$0xf]
    %v168 = vld [vmem:[#allocation7 + $0x34] sm:$0xf]
    %v169 = vld [vmem:[#allocation7 + $0x38] sm:$0xf]
    %v170 = vld [vmem:[#allocation7 + $0x3c] sm:$0xf]
    %v171 = vld [vmem:[%s4] sm:$0x1]
    %v173 = vlaneseq
    %v174 = vshrl.u32 %v173, 7
    %v175 = vsub.s32 0, %v174
    %v176 = vrot.slane %v171, %v175
    %v194 = vunpack.c.l.b16 %v155
    %v195 = vunpack.c.l.b16 %v156
    %v196 = vunpack.c.l.b16 %v157
    %v197 = vunpack.c.l.b16 %v158
    %v198 = vunpack.c.l.b16 %v159
    %v199 = vunpack.c.l.b16 %v160
    %v200 = vunpack.c.l.b16 %v161
    %v201 = vunpack.c.l.b16 %v162
    %v202 = vunpack.c.l.b16 %v163
    %v203 = vunpack.c.l.b16 %v164
    %v204 = vunpack.c.l.b16 %v165
    %v205 = vunpack.c.l.b16 %v166
    %v206 = vunpack.c.l.b16 %v167
    %v207 = vunpack.c.l.b16 %v168
    %v208 = vunpack.c.l.b16 %v169
    %v209 = vunpack.c.l.b16 %v170
    %v210 = vpack.c.b16 %v195, %v194
    %v211 = vpack.c.b16 %v197, %v196
    %v212 = vpack.c.b16 %v199, %v198
    %v213 = vpack.c.b16 %v201, %v200
    %v214 = vpack.c.b16 %v203, %v202
    %v215 = vpack.c.b16 %v205, %v204
    %v216 = vpack.c.b16 %v207, %v206
    %v217 = vpack.c.b16 %v209, %v208
    %226 = vmatprep.subr.bf16.mxu0 0
    %227 = vmatpush1.bf16.msra.mxu0 %v210
    %228 = vmatprep.subr.bf16.mxu0 0
    %229 = vmatpush1.bf16.msra.mxu0 %v211
    %230 = vmatprep.subr.bf16.mxu0 0
    %231 = vmatpush1.bf16.msra.mxu0 %v212
    %232 = vmatprep.subr.bf16.mxu0 0
    %233 = vmatpush1.bf16.msra.mxu0 %v213
    %234 = vmatprep.subr.bf16.mxu0 0
    %235 = vmatpush1.bf16.msra.mxu0 %v214
    %236 = vmatprep.subr.bf16.mxu0 0
    %237 = vmatpush1.bf16.msra.mxu0 %v215
    %238 = vmatprep.subr.bf16.mxu0 0
    %239 = vmatpush1.bf16.msra.mxu0 %v216
    %240 = vmatprep.subr.bf16.mxu0 0
    %241 = vmatpush1.bf16.msra.mxu0 %v217
    %242 = vmatprep.subr.bf16.mxu0 0
    %243 = vmatpush1.bf16.msra.mxu0 0
    %244 = vmatprep.subr.bf16.mxu0 0
    %245 = vmatpush1.bf16.msra.mxu0 0
    %246 = vmatprep.subr.bf16.mxu0 0
    %247 = vmatpush1.bf16.msra.mxu0 0
    %248 = vmatprep.subr.bf16.mxu0 0
    %249 = vmatpush1.bf16.msra.mxu0 0
    %250 = vmatprep.subr.bf16.mxu0 0
    %251 = vmatpush1.bf16.msra.mxu0 0
    %252 = vmatprep.subr.bf16.mxu0 0
    %253 = vmatpush1.bf16.msra.mxu0 0
    %254 = vmatprep.subr.bf16.mxu0 0
    %255 = vmatpush1.bf16.msra.mxu0 0
    %256 = vmatprep.subr.bf16.mxu0 0
    %257 = vmatpush1.bf16.msra.mxu0 0
    %258 = vmatprep.mubr.bf16.mxu0 0
    %259 = vmatmul.mubr.bf16.gmra.mrb[0].mxu0 %v154
    %v260 = vpop.f32.mrb[0].mxu0
    %v261 = vadd.f32 %v176, %v260
    %v262 = vpop.f32.mrb[0].mxu0
    %v263 = vpop.f32.mrb[0].mxu0
    %v264 = vpop.f32.mrb[0].mxu0
    %265 = vdwg.mxu0
    %v266 = vmax.f32 %v261, 0.0
    %v267 = vpack.c.bf16 %v266, %v266
    %v268 = vld [vmem:[#allocation8] sm:$0xf]
    %v269 = vld [vmem:[#allocation8 + $0x4] sm:$0xf]
    %v270 = vld [vmem:[#allocation8 + $0x8] sm:$0xf]
    %v271 = vld [vmem:[#allocation8 + $0xc] sm:$0xf]
    %v272 = vld [vmem:[#allocation8 + $0x10] sm:$0xf]
    %v273 = vld [vmem:[#allocation8 + $0x14] sm:$0xf]
    %v274 = vld [vmem:[#allocation8 + $0x18] sm:$0xf]
    %v275 = vld [vmem:[#allocation8 + $0x1c] sm:$0xf]
    %v276 = vld [vmem:[#allocation8 + $0x20] sm:$0xf]
    %v277 = vld [vmem:[#allocation8 + $0x24] sm:$0xf]
    %v278 = vld [vmem:[#allocation8 + $0x28] sm:$0xf]
    %v279 = vld [vmem:[#allocation8 + $0x2c] sm:$0xf]
    %v280 = vld [vmem:[#allocation8 + $0x30] sm:$0xf]
    %v281 = vld [vmem:[#allocation8 + $0x34] sm:$0xf]
    %v282 = vld [vmem:[#allocation8 + $0x38] sm:$0xf]
    %v283 = vld [vmem:[#allocation8 + $0x3c] sm:$0xf]
    %v284 = vld [vmem:[%s6] sm:$0x1]
    %v286 = vlaneseq
    %v287 = vshrl.u32 %v286, 7
    %v288 = vsub.s32 0, %v287
    %v289 = vrot.slane %v284, %v288
    %v307 = vunpack.c.l.b16 %v268
    %v308 = vunpack.c.l.b16 %v269
    %v309 = vunpack.c.l.b16 %v270
    %v310 = vunpack.c.l.b16 %v271
    %v311 = vunpack.c.l.b16 %v272
    %v312 = vunpack.c.l.b16 %v273
    %v313 = vunpack.c.l.b16 %v274
    %v314 = vunpack.c.l.b16 %v275
    %v315 = vunpack.c.l.b16 %v276
    %v316 = vunpack.c.l.b16 %v277
    %v317 = vunpack.c.l.b16 %v278
    %v318 = vunpack.c.l.b16 %v279
    %v319 = vunpack.c.l.b16 %v280
    %v320 = vunpack.c.l.b16 %v281
    %v321 = vunpack.c.l.b16 %v282
    %v322 = vunpack.c.l.b16 %v283
    %v323 = vpack.c.b16 %v308, %v307
    %v324 = vpack.c.b16 %v310, %v309
    %v325 = vpack.c.b16 %v312, %v311
    %v326 = vpack.c.b16 %v314, %v313
    %v327 = vpack.c.b16 %v316, %v315
    %v328 = vpack.c.b16 %v318, %v317
    %v329 = vpack.c.b16 %v320, %v319
    %v330 = vpack.c.b16 %v322, %v321
    %339 = vmatprep.subr.bf16.mxu0 0
    %340 = vmatpush1.bf16.msra.mxu0 %v323
    %341 = vmatprep.subr.bf16.mxu0 0
    %342 = vmatpush1.bf16.msra.mxu0 %v324
    %343 = vmatprep.subr.bf16.mxu0 0
    %344 = vmatpush1.bf16.msra.mxu0 %v325
    %345 = vmatprep.subr.bf16.mxu0 0
    %346 = vmatpush1.bf16.msra.mxu0 %v326
    %347 = vmatprep.subr.bf16.mxu0 0
    %348 = vmatpush1.bf16.msra.mxu0 %v327
    %349 = vmatprep.subr.bf16.mxu0 0
    %350 = vmatpush1.bf16.msra.mxu0 %v328
    %351 = vmatprep.subr.bf16.mxu0 0
    %352 = vmatpush1.bf16.msra.mxu0 %v329
    %353 = vmatprep.subr.bf16.mxu0 0
    %354 = vmatpush1.bf16.msra.mxu0 %v330
    %355 = vmatprep.subr.bf16.mxu0 0
    %356 = vmatpush1.bf16.msra.mxu0 0
    %357 = vmatprep.subr.bf16.mxu0 0
    %358 = vmatpush1.bf16.msra.mxu0 0
    %359 = vmatprep.subr.bf16.mxu0 0
    %360 = vmatpush1.bf16.msra.mxu0 0
    %361 = vmatprep.subr.bf16.mxu0 0
    %362 = vmatpush1.bf16.msra.mxu0 0
    %363 = vmatprep.subr.bf16.mxu0 0
    %364 = vmatpush1.bf16.msra.mxu0 0
    %365 = vmatprep.subr.bf16.mxu0 0
    %366 = vmatpush1.bf16.msra.mxu0 0
    %367 = vmatprep.subr.bf16.mxu0 0
    %368 = vmatpush1.bf16.msra.mxu0 0
    %369 = vmatprep.subr.bf16.mxu0 0
    %370 = vmatpush1.bf16.msra.mxu0 0
    %371 = vmatprep.mubr.bf16.mxu0 0
    %372 = vmatmul.mubr.bf16.gmra.mrb[0].mxu0 %v267
    %v373 = vpop.f32.mrb[0].mxu0
    %v374 = vadd.f32 %v289, %v373
    %v375 = vpop.f32.mrb[0].mxu0
    %v376 = vpop.f32.mrb[0].mxu0
    %v377 = vpop.f32.mrb[0].mxu0
    %378 = vdwg.mxu0
    %v379 = vxor.u32 %v374, 2147483648
    %v380 = vmul.f32 %v379, 1.442695
    %v381 = vpow.pop %v380
    %v382 = vadd.f32 %v381, 1.0
    %v383 = vrcp.pop %v382
    %v384 = vmul.f32 1.0, %v383
    %vm385 = vcmask 48128
    %386 = vst.msk [vmem:[#allocation10] sm:$0xff] %vm385, %v384
    // Predicated region
    $region46: #{tpu_custom_call.1} parent=1 // pred_check
      _
    $region47: #{tpu_custom_call.1} parent=1 // pred_check_branch
      %388 = sbr.rel (0) target = $region49
    $region48: #{tpu_custom_call.1} parent=1 // pred_region
      %s390 = ssub.s32 128, 128
      %391 = vsyncadd [#allocation4], %s390
      %s393 = sshll.u32 [#allocation10], 4
      %s394 = int_to_ptr.vmem [resolvable:$true] %s393
      %396 = dma.vmem_to_hbm [thread:$0]  %s394, 128, %s7, [#allocation4]
    $region49: #{tpu_custom_call.1} parent=1 // pred_fallthru
      _
    // Predicated region
    $region50: #{tpu_custom_call.1} parent=1 // pred_check
      _
    $region51: #{tpu_custom_call.1} parent=1 // pred_check_branch
      %398 = sbr.rel (0) target = $region53
    $region52: #{tpu_custom_call.1} parent=1 // pred_region
      %399 = dma.done [#allocation4], 128
    $region53: #{tpu_custom_call.1} parent=1 // pred_fallthru
      _
    %400 = vsyncpa [#allocation3], 1
    %401 = vsyncpa [#allocation6], 1
    %402 = vsyncpa [#allocation9], 1
    %403 = vsyncpa [#allocation4], 1

</llo_original>
